<compile_context>
chip_gen: v5e
topology: v5e:2x2
jax: 0.10.0
libtpu: 0.0.40
codegen_flags: <defaults>
</compile_context>

<pallas_src>
import functools

import jax
import jax.numpy as jnp
from jax.experimental import pallas as pl
from jax.experimental.pallas import tpu as pltpu


# ---------------------------------------------------------------------------
# Kernel 1: fused adaptive pooling (over W and over H) + attention MLP.
# Grid (N, H // TH); row-tile axis is "arbitrary" (accumulation + finalize).
# ---------------------------------------------------------------------------
def _pool_attn_kernel(x_ref, w1_ref, s1_ref, t1_ref, wh_ref, bh_ref,
                      ww_ref, bw_ref, ah_ref, aw_ref, xh_acc, xw_acc,
                      *, TH, inv_w, inv_h):
    ht = pl.program_id(1)
    x = x_ref[0]                                           # (TH, W, C) f32

    # pool over W for this block of rows -> rows [ht*TH, ht*TH + TH) of x_h
    off = pl.multiple_of(ht * TH, TH)
    xh_acc[pl.ds(off, TH), :] = jnp.sum(x, axis=1) * inv_w

    # pool over H: accumulate partial column sums across row tiles
    @pl.when(ht == 0)
    def _():
        xw_acc[...] = jnp.zeros_like(xw_acc)

    xw_acc[...] += jnp.sum(x, axis=0)

    # finalize: run the tiny attention MLP entirely in VMEM
    @pl.when(ht == pl.num_programs(1) - 1)
    def _():
        def gate(z, wo_ref, bo_ref):
            y = jnp.dot(z, w1_ref[...], preferred_element_type=jnp.float32)
            y = y * s1_ref[...] + t1_ref[...]                  # conv1 bias + BN folded
            y = y * (jnp.clip(y + 3.0, 0.0, 6.0) * (1.0 / 6.0))  # h_swish
            a = jnp.dot(y, wo_ref[...], preferred_element_type=jnp.float32)
            a = a + bo_ref[...]
            return 1.0 / (1.0 + jnp.exp(-a))                   # sigmoid

        ah_ref[0] = gate(xh_acc[...], wh_ref, bh_ref)           # (H, C)
        aw_ref[0] = gate(xw_acc[...] * inv_h, ww_ref, bw_ref)   # (W, C)


# ---------------------------------------------------------------------------
# Kernel 2: out = identity * a_w * a_h  (row-tiled elementwise, lane-dense)
# ---------------------------------------------------------------------------
def _apply_kernel(x_ref, ah_ref, aw_ref, o_ref):
    x = x_ref[0]               # (TH, W, C)
    aw = aw_ref[0]             # (W, C)  broadcast over rows
    ah = ah_ref[0]             # (TH, C) broadcast over columns
    o_ref[0] = x * aw[None, :, :] * ah[:, None, :]


# ---------------------------------------------------------------------------
# Tile picking: largest multiple-of-8 proper divisor of H fitting the budget.
# ---------------------------------------------------------------------------
def _pick_th(H, W, C, max_bytes=1 << 20):
    best = None
    for t in range(8, H, 8):
        if H % t == 0 and t * W * C * 4 <= max_bytes:
            best = t
    return best if best is not None else H


# ---------------------------------------------------------------------------
# CoordAtt forward (NCHW in / NCHW out).  BN folded (inference mode).
# ---------------------------------------------------------------------------
def coordatt_forward(x_nchw, p):
    N, C, H, W = x_nchw.shape
    x = jnp.transpose(x_nchw, (0, 2, 3, 1)).astype(jnp.float32)   # NHWC
    mip = p['w1'].shape[1]

    TH = _pick_th(H, W, C)
    nht = H // TH

    s1 = p['s1'].reshape(1, mip).astype(jnp.float32)
    t1 = p['t1'].reshape(1, mip).astype(jnp.float32)
    bh = p['bh'].reshape(1, C).astype(jnp.float32)
    bw = p['bw'].reshape(1, C).astype(jnp.float32)

    a_h, a_w = pl.pallas_call(
        functools.partial(_pool_attn_kernel, TH=TH,
                          inv_w=1.0 / W, inv_h=1.0 / H),
        out_shape=(jax.ShapeDtypeStruct((N, H, C), jnp.float32),
                   jax.ShapeDtypeStruct((N, W, C), jnp.float32)),
        grid=(N, nht),
        in_specs=[
            pl.BlockSpec((1, TH, W, C), lambda n, h: (n, h, 0, 0)),
            pl.BlockSpec((C, mip), lambda n, h: (0, 0)),
            pl.BlockSpec((1, mip), lambda n, h: (0, 0)),
            pl.BlockSpec((1, mip), lambda n, h: (0, 0)),
            pl.BlockSpec((mip, C), lambda n, h: (0, 0)),
            pl.BlockSpec((1, C), lambda n, h: (0, 0)),
            pl.BlockSpec((mip, C), lambda n, h: (0, 0)),
            pl.BlockSpec((1, C), lambda n, h: (0, 0)),
        ],
        out_specs=[
            pl.BlockSpec((1, H, C), lambda n, h: (n, 0, 0)),
            pl.BlockSpec((1, W, C), lambda n, h: (n, 0, 0)),
        ],
        scratch_shapes=[pltpu.VMEM((H, C), jnp.float32),
                        pltpu.VMEM((W, C), jnp.float32)],
        compiler_params=pltpu.CompilerParams(
            dimension_semantics=("parallel", "arbitrary"),
            vmem_limit_bytes=48 * 1024 * 1024),
    )(x, p['w1'], s1, t1, p['wh'], bh, p['ww'], bw)

    out = pl.pallas_call(
        _apply_kernel,
        out_shape=jax.ShapeDtypeStruct((N, H, W, C), jnp.float32),
        grid=(N, nht),
        in_specs=[
            pl.BlockSpec((1, TH, W, C), lambda n, h: (n, h, 0, 0)),
            pl.BlockSpec((1, TH, C), lambda n, h: (n, h, 0)),
            pl.BlockSpec((1, W, C), lambda n, h: (n, 0, 0)),
        ],
        out_specs=pl.BlockSpec((1, TH, W, C), lambda n, h: (n, h, 0, 0)),
        compiler_params=pltpu.CompilerParams(
            dimension_semantics=("parallel", "parallel"),
            vmem_limit_bytes=48 * 1024 * 1024),
    )(x, a_h, a_w)

    return jnp.transpose(out, (0, 3, 1, 2))                      # NCHW


# ---------------------------------------------------------------------------
# Deterministic parameter init (eval-mode BN folded into scale / shift)
# ---------------------------------------------------------------------------
def init_params(key, inp, oup, reduction=32):
    mip = max(8, inp // reduction)
    ks = jax.random.split(key, 10)
    eps = 1e-5

    def w(k, shape, std=0.1):
        return (std * jax.random.normal(k, shape)).astype(jnp.float32)

    w1 = w(ks[0], (inp, mip))                      # conv1 weight (1x1)
    b1 = w(ks[1], (mip,), 0.05)                    # conv1 bias
    gamma = 1.0 + 0.1 * jax.random.normal(ks[2], (mip,))
    beta = 0.1 * jax.random.normal(ks[3], (mip,))
    mean = 0.1 * jax.random.normal(ks[4], (mip,))
    var = 1.0 + 0.1 * jax.random.uniform(ks[5], (mip,))
    s1 = (gamma / jnp.sqrt(var + eps)).astype(jnp.float32)
    t1 = (b1 * s1 + beta - mean * s1).astype(jnp.float32)

    wh = w(ks[6], (mip, oup))
    bh = w(ks[7], (oup,), 0.05)
    ww = w(ks[8], (mip, oup))
    bw = w(ks[9], (oup,), 0.05)
    return dict(w1=w1, s1=s1, t1=t1, wh=wh, bh=bh, ww=ww, bw=bw)


# ---------------------------------------------------------------------------
# Pure-JAX (XLA) reference for a correctness sanity check
# ---------------------------------------------------------------------------
def ref_forward(x_nchw, p):
    N, C, H, W = x_nchw.shape
    x_h = jnp.mean(x_nchw, axis=3, keepdims=True)               # (N,C,H,1)
    x_w = jnp.mean(x_nchw, axis=2, keepdims=True)               # (N,C,1,W)
    x_w = jnp.transpose(x_w, (0, 1, 3, 2))                      # (N,C,W,1)
    y = jnp.concatenate([x_h, x_w], axis=2)                     # (N,C,H+W,1)
    y = jnp.einsum('nchw,cm->nmhw', y, p['w1'])
    y = y * p['s1'][None, :, None, None] + p['t1'][None, :, None, None]
    y = y * jnp.clip(y + 3.0, 0.0, 6.0) / 6.0                   # h_swish
    yh, yw = y[:, :, :H, :], y[:, :, H:, :]
    yw = jnp.transpose(yw, (0, 1, 3, 2))                        # (N,mip,1,W)
    a_h = jax.nn.sigmoid(jnp.einsum('nmhw,mo->nohw', yh, p['wh'])
                         + p['bh'][None, :, None, None])
    a_w = jax.nn.sigmoid(jnp.einsum('nmhw,mo->nohw', yw, p['ww'])
                         + p['bw'][None, :, None, None])
    return x_nchw * a_w * a_h


if __name__ == "__main__":
    key = jax.random.PRNGKey(0)
    kx, kp = jax.random.split(key)

    N, C, H, W = 2, 32, 16, 16                     # CoordAtt(inp=32, oup=32)
    x = jax.random.normal(kx, (N, C, H, W), jnp.float32)
    params = init_params(kp, C, C)

    out = jax.block_until_ready(coordatt_forward(x, params))
    ref = jax.block_until_ready(ref_forward(x, params))

    assert out.shape == (N, C, H, W), out.shape
    rel_err = float(jnp.linalg.norm(out - ref) / (jnp.linalg.norm(ref) + 1e-8))
    assert rel_err < 2e-2, f"relative error too large: {rel_err}"

    print("KERNEL_OK")
</pallas_src>

<mosaic_0001>
module attributes {stable_mosaic.version = 11 : i64} {
  func.func @_pool_attn_kernel(%arg0: i32, %arg1: i32, %arg2: memref<1x8x16x32xf32, #tpu.memory_space<vmem>>, %arg3: memref<32x8xf32, #tpu.memory_space<vmem>>, %arg4: memref<1x8xf32, #tpu.memory_space<vmem>>, %arg5: memref<1x8xf32, #tpu.memory_space<vmem>>, %arg6: memref<8x32xf32, #tpu.memory_space<vmem>>, %arg7: memref<1x32xf32, #tpu.memory_space<vmem>>, %arg8: memref<8x32xf32, #tpu.memory_space<vmem>>, %arg9: memref<1x32xf32, #tpu.memory_space<vmem>>, %arg10: memref<1x16x32xf32, #tpu.memory_space<vmem>>, %arg11: memref<1x16x32xf32, #tpu.memory_space<vmem>>, %arg12: memref<16x32xf32, #tpu.memory_space<vmem>>, %arg13: memref<16x32xf32, #tpu.memory_space<vmem>>) attributes {dimension_semantics = [#tpu.dimension_semantics<parallel>, #tpu.dimension_semantics<arbitrary>], iteration_bounds = array<i64: 2, 2>, scalar_prefetch = 0 : i64, scratch_operands = 2 : i64, tpu.core_type = #tpu.core_type<tc>, window_params = [{transform_indices = @transform_0, window_bounds = array<i64: 1, 8, 16, 32>}, {pipeline_mode = #tpu.pipeline_mode<synchronous>, transform_indices = @transform_1, window_bounds = array<i64: 32, 8>}, {pipeline_mode = #tpu.pipeline_mode<synchronous>, transform_indices = @transform_2, window_bounds = array<i64: 1, 8>}, {pipeline_mode = #tpu.pipeline_mode<synchronous>, transform_indices = @transform_3, window_bounds = array<i64: 1, 8>}, {pipeline_mode = #tpu.pipeline_mode<synchronous>, transform_indices = @transform_4, window_bounds = array<i64: 8, 32>}, {pipeline_mode = #tpu.pipeline_mode<synchronous>, transform_indices = @transform_5, window_bounds = array<i64: 1, 32>}, {pipeline_mode = #tpu.pipeline_mode<synchronous>, transform_indices = @transform_6, window_bounds = array<i64: 8, 32>}, {pipeline_mode = #tpu.pipeline_mode<synchronous>, transform_indices = @transform_7, window_bounds = array<i64: 1, 32>}, {transform_indices = @transform_8, window_bounds = array<i64: 1, 16, 32>}, {transform_indices = @transform_9, window_bounds = array<i64: 1, 16, 32>}]} {
    %c0 = arith.constant 0 : index
    %c0_0 = arith.constant 0 : index
    %c0_1 = arith.constant 0 : index
    %c0_2 = arith.constant 0 : index
    %0 = vector.load %arg2[%c0, %c0_0, %c0_1, %c0_2] : memref<1x8x16x32xf32, #tpu.memory_space<vmem>>, vector<1x8x16x32xf32>
    %1 = vector.shape_cast %0 : vector<1x8x16x32xf32> to vector<8x16x32xf32>
    %c8_i32 = arith.constant 8 : i32
    %2 = arith.muli %arg1, %c8_i32 : i32
    %3 = tpu.assume_multiple %2, 8 : i32
    %cst = arith.constant dense<0.000000e+00> : vector<8x32xf32>
    %4 = vector.multi_reduction <add>, %1, %cst [1] : vector<8x16x32xf32> to vector<8x32xf32>
    %cst_3 = arith.constant 6.250000e-02 : f32
    %5 = vector.broadcast %cst_3 : f32 to vector<8x32xf32>
    %6 = arith.mulf %4, %5 : vector<8x32xf32>
    %7 = arith.index_cast %3 : i32 to index
    %c0_4 = arith.constant 0 : index
    %8 = vector.load %arg12[%7, %c0_4] : memref<16x32xf32, #tpu.memory_space<vmem>>, vector<8x32xf32>
    tpu.vector_store %arg12[%7, %c0_4], %6 {strides = array<i32>} : memref<16x32xf32, #tpu.memory_space<vmem>>, vector<8x32xf32>,
    %c0_i32 = arith.constant 0 : i32
    %9 = arith.cmpi eq, %arg1, %c0_i32 : i32
    %10 = arith.extui %9 : i1 to i32
    %c0_i32_5 = arith.constant 0 : i32
    %11 = arith.cmpi ne, %10, %c0_i32_5 : i32
    scf.if %11 {
      %cst_12 = arith.constant 0.000000e+00 : f32
      %19 = vector.broadcast %cst_12 : f32 to vector<16x32xf32>
      %c0_13 = arith.constant 0 : index
      %c0_14 = arith.constant 0 : index
      %20 = vector.load %arg13[%c0_13, %c0_14] : memref<16x32xf32, #tpu.memory_space<vmem>>, vector<16x32xf32>
      tpu.vector_store %arg13[%c0_13, %c0_14], %19 {strides = array<i32>} : memref<16x32xf32, #tpu.memory_space<vmem>>, vector<16x32xf32>,
    } else {
    }
    %c0_6 = arith.constant 0 : index
    %c0_7 = arith.constant 0 : index
    %12 = vector.load %arg13[%c0_6, %c0_7] : memref<16x32xf32, #tpu.memory_space<vmem>>, vector<16x32xf32>
    %cst_8 = arith.constant dense<0.000000e+00> : vector<16x32xf32>
    %13 = vector.multi_reduction <add>, %1, %cst_8 [0] : vector<8x16x32xf32> to vector<16x32xf32>
    %14 = arith.addf %12, %13 : vector<16x32xf32>
    %c0_9 = arith.constant 0 : index
    %c0_10 = arith.constant 0 : index
    %15 = vector.load %arg13[%c0_9, %c0_10] : memref<16x32xf32, #tpu.memory_space<vmem>>, vector<16x32xf32>
    tpu.vector_store %arg13[%c0_9, %c0_10], %14 {strides = array<i32>} : memref<16x32xf32, #tpu.memory_space<vmem>>, vector<16x32xf32>,
    %c1_i32 = arith.constant 1 : i32
    %16 = arith.cmpi eq, %arg1, %c1_i32 : i32
    %17 = arith.extui %16 : i1 to i32
    %c0_i32_11 = arith.constant 0 : i32
    %18 = arith.cmpi ne, %17, %c0_i32_11 : i32
    scf.if %18 {
      %c0_12 = arith.constant 0 : index
      %c0_13 = arith.constant 0 : index
      %19 = vector.load %arg12[%c0_12, %c0_13] : memref<16x32xf32, #tpu.memory_space<vmem>>, vector<16x32xf32>
      %c0_14 = arith.constant 0 : index
      %c0_15 = arith.constant 0 : index
      %20 = vector.load %arg3[%c0_14, %c0_15] : memref<32x8xf32, #tpu.memory_space<vmem>>, vector<32x8xf32>
      %cst_16 = arith.constant dense<0.000000e+00> : vector<16x8xf32>
      %21 = tpu.matmul %19, %20, %cst_16 {dimension_numbers = #tpu.dot_dimension_numbers<[1], [0], [0], [1], [0, 0, 1, 1], [], []>} : vector<16x32xf32>, vector<32x8xf32>, vector<16x8xf32> -> vector<16x8xf32>
      %c0_17 = arith.constant 0 : index
      %c0_18 = arith.constant 0 : index
      %22 = vector.load %arg4[%c0_17, %c0_18] : memref<1x8xf32, #tpu.memory_space<vmem>>, vector<1x8xf32>
      %23 = vector.broadcast %22 : vector<1x8xf32> to vector<16x8xf32>
      %24 = arith.mulf %21, %23 : vector<16x8xf32>
      %c0_19 = arith.constant 0 : index
      %c0_20 = arith.constant 0 : index
      %25 = vector.load %arg5[%c0_19, %c0_20] : memref<1x8xf32, #tpu.memory_space<vmem>>, vector<1x8xf32>
      %26 = vector.broadcast %25 : vector<1x8xf32> to vector<16x8xf32>
      %27 = arith.addf %24, %26 : vector<16x8xf32>
      %cst_21 = arith.constant 3.000000e+00 : f32
      %28 = vector.broadcast %cst_21 : f32 to vector<16x8xf32>
      %29 = arith.addf %27, %28 : vector<16x8xf32>
      %cst_22 = arith.constant 0.000000e+00 : f32
      %cst_23 = arith.constant 6.000000e+00 : f32
      %30 = vector.broadcast %cst_22 : f32 to vector<16x8xf32>
      %31 = arith.maximumf %30, %29 : vector<16x8xf32>
      %32 = vector.broadcast %cst_23 : f32 to vector<16x8xf32>
      %33 = arith.minimumf %32, %31 : vector<16x8xf32>
      %cst_24 = arith.constant 0.166666672 : f32
      %34 = vector.broadcast %cst_24 : f32 to vector<16x8xf32>
      %35 = arith.mulf %33, %34 : vector<16x8xf32>
      %36 = arith.mulf %27, %35 : vector<16x8xf32>
      %c0_25 = arith.constant 0 : index
      %c0_26 = arith.constant 0 : index
      %37 = vector.load %arg6[%c0_25, %c0_26] : memref<8x32xf32, #tpu.memory_space<vmem>>, vector<8x32xf32>
      %cst_27 = arith.constant dense<0.000000e+00> : vector<16x32xf32>
      %38 = tpu.matmul %36, %37, %cst_27 {dimension_numbers = #tpu.dot_dimension_numbers<[1], [0], [0], [1], [0, 0, 1, 1], [], []>} : vector<16x8xf32>, vector<8x32xf32>, vector<16x32xf32> -> vector<16x32xf32>
      %c0_28 = arith.constant 0 : index
      %c0_29 = arith.constant 0 : index
      %39 = vector.load %arg7[%c0_28, %c0_29] : memref<1x32xf32, #tpu.memory_space<vmem>>, vector<1x32xf32>
      %40 = vector.broadcast %39 : vector<1x32xf32> to vector<16x32xf32>
      %41 = arith.addf %38, %40 : vector<16x32xf32>
      %cst_30 = arith.constant 0.000000e+00 : f32
      %42 = vector.broadcast %cst_30 : f32 to vector<16x32xf32>
      %43 = arith.subf %42, %41 : vector<16x32xf32>
      %44 = math.exp %43 : vector<16x32xf32>
      %cst_31 = arith.constant 1.000000e+00 : f32
      %45 = vector.broadcast %cst_31 : f32 to vector<16x32xf32>
      %46 = arith.addf %45, %44 : vector<16x32xf32>
      %cst_32 = arith.constant 1.000000e+00 : f32
      %47 = vector.broadcast %cst_32 : f32 to vector<16x32xf32>
      %48 = arith.divf %47, %46 : vector<16x32xf32>
      %c0_33 = arith.constant 0 : index
      %c0_34 = arith.constant 0 : index
      %c0_35 = arith.constant 0 : index
      %49 = vector.load %arg10[%c0_33, %c0_34, %c0_35] : memref<1x16x32xf32, #tpu.memory_space<vmem>>, vector<1x16x32xf32>
      %50 = vector.shape_cast %49 : vector<1x16x32xf32> to vector<16x32xf32>
      %51 = vector.shape_cast %48 : vector<16x32xf32> to vector<1x16x32xf32>
      tpu.vector_store %arg10[%c0_33, %c0_34, %c0_35], %51 {strides = array<i32>} : memref<1x16x32xf32, #tpu.memory_space<vmem>>, vector<1x16x32xf32>,
      %c0_36 = arith.constant 0 : index
      %c0_37 = arith.constant 0 : index
      %52 = vector.load %arg13[%c0_36, %c0_37] : memref<16x32xf32, #tpu.memory_space<vmem>>, vector<16x32xf32>
      %cst_38 = arith.constant 6.250000e-02 : f32
      %53 = vector.broadcast %cst_38 : f32 to vector<16x32xf32>
      %54 = arith.mulf %52, %53 : vector<16x32xf32>
      %c0_39 = arith.constant 0 : index
      %c0_40 = arith.constant 0 : index
      %55 = vector.load %arg3[%c0_39, %c0_40] : memref<32x8xf32, #tpu.memory_space<vmem>>, vector<32x8xf32>
      %cst_41 = arith.constant dense<0.000000e+00> : vector<16x8xf32>
      %56 = tpu.matmul %54, %55, %cst_41 {dimension_numbers = #tpu.dot_dimension_numbers<[1], [0], [0], [1], [0, 0, 1, 1], [], []>} : vector<16x32xf32>, vector<32x8xf32>, vector<16x8xf32> -> vector<16x8xf32>
      %c0_42 = arith.constant 0 : index
      %c0_43 = arith.constant 0 : index
      %57 = vector.load %arg4[%c0_42, %c0_43] : memref<1x8xf32, #tpu.memory_space<vmem>>, vector<1x8xf32>
      %58 = vector.broadcast %57 : vector<1x8xf32> to vector<16x8xf32>
      %59 = arith.mulf %56, %58 : vector<16x8xf32>
      %c0_44 = arith.constant 0 : index
      %c0_45 = arith.constant 0 : index
      %60 = vector.load %arg5[%c0_44, %c0_45] : memref<1x8xf32, #tpu.memory_space<vmem>>, vector<1x8xf32>
      %61 = vector.broadcast %60 : vector<1x8xf32> to vector<16x8xf32>
      %62 = arith.addf %59, %61 : vector<16x8xf32>
      %cst_46 = arith.constant 3.000000e+00 : f32
      %63 = vector.broadcast %cst_46 : f32 to vector<16x8xf32>
      %64 = arith.addf %62, %63 : vector<16x8xf32>
      %cst_47 = arith.constant 0.000000e+00 : f32
      %cst_48 = arith.constant 6.000000e+00 : f32
      %65 = vector.broadcast %cst_47 : f32 to vector<16x8xf32>
      %66 = arith.maximumf %65, %64 : vector<16x8xf32>
      %67 = vector.broadcast %cst_48 : f32 to vector<16x8xf32>
      %68 = arith.minimumf %67, %66 : vector<16x8xf32>
      %cst_49 = arith.constant 0.166666672 : f32
      %69 = vector.broadcast %cst_49 : f32 to vector<16x8xf32>
      %70 = arith.mulf %68, %69 : vector<16x8xf32>
      %71 = arith.mulf %62, %70 : vector<16x8xf32>
      %c0_50 = arith.constant 0 : index
      %c0_51 = arith.constant 0 : index
      %72 = vector.load %arg8[%c0_50, %c0_51] : memref<8x32xf32, #tpu.memory_space<vmem>>, vector<8x32xf32>
      %cst_52 = arith.constant dense<0.000000e+00> : vector<16x32xf32>
      %73 = tpu.matmul %71, %72, %cst_52 {dimension_numbers = #tpu.dot_dimension_numbers<[1], [0], [0], [1], [0, 0, 1, 1], [], []>} : vector<16x8xf32>, vector<8x32xf32>, vector<16x32xf32> -> vector<16x32xf32>
      %c0_53 = arith.constant 0 : index
      %c0_54 = arith.constant 0 : index
      %74 = vector.load %arg9[%c0_53, %c0_54] : memref<1x32xf32, #tpu.memory_space<vmem>>, vector<1x32xf32>
      %75 = vector.broadcast %74 : vector<1x32xf32> to vector<16x32xf32>
      %76 = arith.addf %73, %75 : vector<16x32xf32>
      %cst_55 = arith.constant 0.000000e+00 : f32
      %77 = vector.broadcast %cst_55 : f32 to vector<16x32xf32>
      %78 = arith.subf %77, %76 : vector<16x32xf32>
      %79 = math.exp %78 : vector<16x32xf32>
      %cst_56 = arith.constant 1.000000e+00 : f32
      %80 = vector.broadcast %cst_56 : f32 to vector<16x32xf32>
      %81 = arith.addf %80, %79 : vector<16x32xf32>
      %cst_57 = arith.constant 1.000000e+00 : f32
      %82 = vector.broadcast %cst_57 : f32 to vector<16x32xf32>
      %83 = arith.divf %82, %81 : vector<16x32xf32>
      %c0_58 = arith.constant 0 : index
      %c0_59 = arith.constant 0 : index
      %c0_60 = arith.constant 0 : index
      %84 = vector.load %arg11[%c0_58, %c0_59, %c0_60] : memref<1x16x32xf32, #tpu.memory_space<vmem>>, vector<1x16x32xf32>
      %85 = vector.shape_cast %84 : vector<1x16x32xf32> to vector<16x32xf32>
      %86 = vector.shape_cast %83 : vector<16x32xf32> to vector<1x16x32xf32>
      tpu.vector_store %arg11[%c0_58, %c0_59, %c0_60], %86 {strides = array<i32>} : memref<1x16x32xf32, #tpu.memory_space<vmem>>, vector<1x16x32xf32>,
    } else {
    }
    return
  }
  func.func @transform_0(%arg0: i32, %arg1: i32) -> (i32, i32, i32, i32) {
    %c0_i32 = arith.constant 0 : i32
    %c0_i32_0 = arith.constant 0 : i32
    %c0_i32_1 = arith.constant 0 : i32
    return %arg0, %arg1, %c0_i32, %c0_i32_0 : i32, i32, i32, i32
  }
  func.func @transform_1(%arg0: i32, %arg1: i32) -> (i32, i32) {
    %c0_i32 = arith.constant 0 : i32
    %c0_i32_0 = arith.constant 0 : i32
    %c0_i32_1 = arith.constant 0 : i32
    return %c0_i32, %c0_i32_0 : i32, i32
  }
  func.func @transform_2(%arg0: i32, %arg1: i32) -> (i32, i32) {
    %c0_i32 = arith.constant 0 : i32
    %c0_i32_0 = arith.constant 0 : i32
    %c0_i32_1 = arith.constant 0 : i32
    return %c0_i32, %c0_i32_0 : i32, i32
  }
  func.func @transform_3(%arg0: i32, %arg1: i32) -> (i32, i32) {
    %c0_i32 = arith.constant 0 : i32
    %c0_i32_0 = arith.constant 0 : i32
    %c0_i32_1 = arith.constant 0 : i32
    return %c0_i32, %c0_i32_0 : i32, i32
  }
  func.func @transform_4(%arg0: i32, %arg1: i32) -> (i32, i32) {
    %c0_i32 = arith.constant 0 : i32
    %c0_i32_0 = arith.constant 0 : i32
    %c0_i32_1 = arith.constant 0 : i32
    return %c0_i32, %c0_i32_0 : i32, i32
  }
  func.func @transform_5(%arg0: i32, %arg1: i32) -> (i32, i32) {
    %c0_i32 = arith.constant 0 : i32
    %c0_i32_0 = arith.constant 0 : i32
    %c0_i32_1 = arith.constant 0 : i32
    return %c0_i32, %c0_i32_0 : i32, i32
  }
  func.func @transform_6(%arg0: i32, %arg1: i32) -> (i32, i32) {
    %c0_i32 = arith.constant 0 : i32
    %c0_i32_0 = arith.constant 0 : i32
    %c0_i32_1 = arith.constant 0 : i32
    return %c0_i32, %c0_i32_0 : i32, i32
  }
  func.func @transform_7(%arg0: i32, %arg1: i32) -> (i32, i32) {
    %c0_i32 = arith.constant 0 : i32
    %c0_i32_0 = arith.constant 0 : i32
    %c0_i32_1 = arith.constant 0 : i32
    return %c0_i32, %c0_i32_0 : i32, i32
  }
  func.func @transform_8(%arg0: i32, %arg1: i32) -> (i32, i32, i32) {
    %c0_i32 = arith.constant 0 : i32
    %c0_i32_0 = arith.constant 0 : i32
    %c0_i32_1 = arith.constant 0 : i32
    return %arg0, %c0_i32, %c0_i32_0 : i32, i32, i32
  }
  func.func @transform_9(%arg0: i32, %arg1: i32) -> (i32, i32, i32) {
    %c0_i32 = arith.constant 0 : i32
    %c0_i32_0 = arith.constant 0 : i32
    %c0_i32_1 = arith.constant 0 : i32
    return %arg0, %c0_i32, %c0_i32_0 : i32, i32, i32
  }
}

</mosaic_0001>

<llo_original>
// kernel: tpu_custom_call.1
$region0: #{tpu_custom_call.1}
  #allocation0 [shape = 'u32[]', space=smem, size = 0x4, offset = 0x4, fixed_abs, tag = 'smem constant byte address 0x4 - core index']
  #allocation1 [shape = 'u32[72,128]{1,0:T(1,128)}', space=vmem, size = 0x9000, scoped, tag = 'internal scratch']
  #allocation2 [shape = 'f32[16,32]{1,0:T(8,128)}', space=vmem, size = 0x2000, scoped, tag = 'scratch operand']
  #allocation3 [shape = 'f32[16,32]{1,0:T(8,128)}', space=vmem, size = 0x2000, scoped, tag = 'scratch operand']
  %s0 = inlined_call_operand.hbm [shape: f32[2,16,16,32], index: 0, kind: input, shape index: {}]
  %s1 = inlined_call_operand.vmem [shape: f32[32,8], index: 1, kind: input, shape index: {}]
  %s2 = inlined_call_operand.vmem [shape: f32[1,8], index: 2, kind: input, shape index: {}]
  %s3 = inlined_call_operand.vmem [shape: f32[1,8], index: 3, kind: input, shape index: {}]
  %s4 = inlined_call_operand.vmem [shape: f32[8,32], index: 4, kind: input, shape index: {}]
  %s5 = inlined_call_operand.vmem [shape: f32[1,32], index: 5, kind: input, shape index: {}]
  %s6 = inlined_call_operand.vmem [shape: f32[8,32], index: 6, kind: input, shape index: {}]
  %s7 = inlined_call_operand.vmem [shape: f32[1,32], index: 7, kind: input, shape index: {}]
  %s8 = inlined_call_operand.hbm [shape: f32[2,16,32], index: 8, kind: output, shape index: {0}]
  %s9 = inlined_call_operand.hbm [shape: f32[2,16,32], index: 9, kind: output, shape index: {1}]
  %10 = xla_tuple %s8, %s9
  %s11 = sld [smem:[#allocation0]]
  $region85: #{tpu_custom_call.1} parent=0
    _
  %s13 = ssub.s32 1, %s11
  %s14 = scalar_select 0, %s13, %s11
  $region1: #{tpu_custom_call.1} parent=0
    #allocation4 [shape = 'u8[131072]{0}', space=vmem, size = 0x20000, scoped, tag = 'input window, operand 0']
    #allocation5 [shape = 's32[2]{0}', space=sflag, size = 0x8, scoped, tag = 'scoped memory for tpu_custom_call.1']
    #allocation6 [shape = 's32[2]{0}', space=sflag, size = 0x8, scoped, tag = 'scoped memory for tpu_custom_call.1']
    #allocation7 [shape = 'u8[16384]{0}', space=vmem, size = 0x4000, scoped, tag = 'output window, operand 0']
    #allocation8 [shape = 'u8[16384]{0}', space=vmem, size = 0x4000, scoped, tag = 'output window, operand 1']
    #allocation9 [shape = 's32[2]{0}', space=sflag, size = 0x8, scoped, tag = 'scoped memory for tpu_custom_call.1']
    %15 = vsyncpa [#allocation5], 0
    %s16 = scalar_lea.sflag [#allocation5], 1
    %17 = vsyncpa %s16, 0
    %18 = vsyncpa [#allocation6], 0
    %s19 = scalar_lea.sflag [#allocation6], 1
    %20 = vsyncpa %s19, 0
    %21 = vsyncpa [#allocation9], 0
    %s22 = scalar_lea.sflag [#allocation9], 1
    %23 = vsyncpa %s22, 0
    loop: start=0, step=1, limit=6
    $region2: #{tpu_custom_call.1} parent=1 // loop_pre_header
      _
    $region3: #{tpu_custom_call.1} parent=1 // loop_header
      %s25 = sphi 0, %s29
      %p26 = scmp.ge.s32.totalorder %s25, 6
      %s32 = sphi 0, %s44
      %s33 = sphi 0, %s40
      %s34 = sphi 0, %s32
      %s35 = sphi 0, %s33
      %s36 = sphi 0, %s34
      %s37 = sphi 0, %s35
      %s49 = sphi 0, %s51
      %s52 = sphi 0, %s49
      %s53 = sphi 0, %s52
      %s69 = sphi 0, %s53
      %s73 = sphi 0, %s73
      %s75 = sphi 0, %s73
      %s76 = sphi 0, %s75
      %s90 = sphi 0, %s76
      %s94 = sphi 0, %s94
      %s96 = sphi 0, %s94
      %s97 = sphi 0, %s96
      %s111 = sphi 0, %s97
      %s115 = sphi 0, %s115
      %s117 = sphi 0, %s115
      %s118 = sphi 0, %s117
      %s132 = sphi 0, %s118
      %s136 = sphi 0, %s136
      %s138 = sphi 0, %s136
      %s139 = sphi 0, %s138
      %s153 = sphi 0, %s139
      %s157 = sphi 0, %s157
      %s159 = sphi 0, %s157
      %s160 = sphi 0, %s159
      %s174 = sphi 0, %s160
      %s178 = sphi 0, %s178
      %s180 = sphi 0, %s178
      %s181 = sphi 0, %s180
      %s195 = sphi 0, %s181
      %s199 = sphi 0, %s199
      %s201 = sphi 0, %s199
      %s202 = sphi 0, %s201
      %s216 = sphi 0, %s202
      %s222 = sphi 0, %s224
      %s225 = sphi 0, %s222
      %s226 = sphi 0, %s225
      %s242 = sphi 0, %s226
      %s248 = sphi 0, %s250
      %s251 = sphi 0, %s248
      %s252 = sphi 0, %s251
      %s268 = sphi 0, %s252
    $region4: #{tpu_custom_call.1} parent=1 // loop_header_branch
      %28 = sbr.rel (%p26) target = $region8
    $region5: #{tpu_custom_call.1} parent=1 // loop_body
      %s30 = ssub.s32 %s25, 1
      %s31 = ssub.s32 %s25, 2
      %s38 = sadd.s32 1, %s33
      %p39 = scmp.ge.s32.totalorder %s38, 2
      %s40 = scalar_select %p39, 0, %s38
      %s41 = sadd.s32 1, %s32
      %s42 = scalar_select %p39, %s41, %s32
      %p43 = scmp.ge.s32.totalorder %s42, 2
      %s44 = scalar_select %p43, 0, %s42
      %s45 = ssub.s32 %s32, %s44
      %s46 = ssub.s32 %s33, %s40
      %s47 = sor.u32 %s45, %s46
      %p48 = scmp.eq.s32.totalorder %s47, 0
      %s50 = sadd.s32 %s49, 1
      %s51 = scalar_select %p48, %s49, %s50
      %p54 = pneg %p48
      %p55 = scmp.eq.s32.totalorder %s25, 3
      %p56 = por %p54, %p55
      %p57 = scmp.ne.s32.totalorder %s49, %s52
      %p58 = scmp.eq.s32.totalorder %s25, 0
      %p59 = por %p57, %p58
      %p60 = scmp.ne.s32.totalorder %s49, %s52
      %p61 = scmp.eq.s32.totalorder %s30, 3
      %p62 = por %p60, %p61
      %p63 = scmp.ne.s32.totalorder %s52, %s53
      %p64 = scmp.eq.s32.totalorder %s30, 0
      %p65 = por %p63, %p64
      %p66 = scmp.ne.s32.totalorder %s52, %s53
      %p67 = scmp.eq.s32.totalorder %s31, 3
      %p68 = por %p66, %p67
      %p70 = scmp.ne.s32.totalorder %s53, %s69
      %p71 = scmp.eq.s32.totalorder %s31, 0
      %p72 = por %p70, %p71
      %s74 = sadd.s32 %s73, 1
      %p77 = scmp.eq.s32.totalorder %s25, 3
      %p78 = scmp.ne.s32.totalorder %s73, %s75
      %p79 = scmp.eq.s32.totalorder %s25, 0
      %p80 = por %p78, %p79
      %p81 = scmp.ne.s32.totalorder %s73, %s75
      %p82 = scmp.eq.s32.totalorder %s30, 3
      %p83 = por %p81, %p82
      %p84 = scmp.ne.s32.totalorder %s75, %s76
      %p85 = scmp.eq.s32.totalorder %s30, 0
      %p86 = por %p84, %p85
      %p87 = scmp.ne.s32.totalorder %s75, %s76
      %p88 = scmp.eq.s32.totalorder %s31, 3
      %p89 = por %p87, %p88
      %p91 = scmp.ne.s32.totalorder %s76, %s90
      %p92 = scmp.eq.s32.totalorder %s31, 0
      %p93 = por %p91, %p92
      %s95 = sadd.s32 %s94, 1
      %p98 = scmp.eq.s32.totalorder %s25, 3
      %p99 = scmp.ne.s32.totalorder %s94, %s96
      %p100 = scmp.eq.s32.totalorder %s25, 0
      %p101 = por %p99, %p100
      %p102 = scmp.ne.s32.totalorder %s94, %s96
      %p103 = scmp.eq.s32.totalorder %s30, 3
      %p104 = por %p102, %p103
      %p105 = scmp.ne.s32.totalorder %s96, %s97
      %p106 = scmp.eq.s32.totalorder %s30, 0
      %p107 = por %p105, %p106
      %p108 = scmp.ne.s32.totalorder %s96, %s97
      %p109 = scmp.eq.s32.totalorder %s31, 3
      %p110 = por %p108, %p109
      %p112 = scmp.ne.s32.totalorder %s97, %s111
      %p113 = scmp.eq.s32.totalorder %s31, 0
      %p114 = por %p112, %p113
      %s116 = sadd.s32 %s115, 1
      %p119 = scmp.eq.s32.totalorder %s25, 3
      %p120 = scmp.ne.s32.totalorder %s115, %s117
      %p121 = scmp.eq.s32.totalorder %s25, 0
      %p122 = por %p120, %p121
      %p123 = scmp.ne.s32.totalorder %s115, %s117
      %p124 = scmp.eq.s32.totalorder %s30, 3
      %p125 = por %p123, %p124
      %p126 = scmp.ne.s32.totalorder %s117, %s118
      %p127 = scmp.eq.s32.totalorder %s30, 0
      %p128 = por %p126, %p127
      %p129 = scmp.ne.s32.totalorder %s117, %s118
      %p130 = scmp.eq.s32.totalorder %s31, 3
      %p131 = por %p129, %p130
      %p133 = scmp.ne.s32.totalorder %s118, %s132
      %p134 = scmp.eq.s32.totalorder %s31, 0
      %p135 = por %p133, %p134
      %s137 = sadd.s32 %s136, 1
      %p140 = scmp.eq.s32.totalorder %s25, 3
      %p141 = scmp.ne.s32.totalorder %s136, %s138
      %p142 = scmp.eq.s32.totalorder %s25, 0
      %p143 = por %p141, %p142
      %p144 = scmp.ne.s32.totalorder %s136, %s138
      %p145 = scmp.eq.s32.totalorder %s30, 3
      %p146 = por %p144, %p145
      %p147 = scmp.ne.s32.totalorder %s138, %s139
      %p148 = scmp.eq.s32.totalorder %s30, 0
      %p149 = por %p147, %p148
      %p150 = scmp.ne.s32.totalorder %s138, %s139
      %p151 = scmp.eq.s32.totalorder %s31, 3
      %p152 = por %p150, %p151
      %p154 = scmp.ne.s32.totalorder %s139, %s153
      %p155 = scmp.eq.s32.totalorder %s31, 0
      %p156 = por %p154, %p155
      %s158 = sadd.s32 %s157, 1
      %p161 = scmp.eq.s32.totalorder %s25, 3
      %p162 = scmp.ne.s32.totalorder %s157, %s159
      %p163 = scmp.eq.s32.totalorder %s25, 0
      %p164 = por %p162, %p163
      %p165 = scmp.ne.s32.totalorder %s157, %s159
      %p166 = scmp.eq.s32.totalorder %s30, 3
      %p167 = por %p165, %p166
      %p168 = scmp.ne.s32.totalorder %s159, %s160
      %p169 = scmp.eq.s32.totalorder %s30, 0
      %p170 = por %p168, %p169
      %p171 = scmp.ne.s32.totalorder %s159, %s160
      %p172 = scmp.eq.s32.totalorder %s31, 3
      %p173 = por %p171, %p172
      %p175 = scmp.ne.s32.totalorder %s160, %s174
      %p176 = scmp.eq.s32.totalorder %s31, 0
      %p177 = por %p175, %p176
      %s179 = sadd.s32 %s178, 1
      %p182 = scmp.eq.s32.totalorder %s25, 3
      %p183 = scmp.ne.s32.totalorder %s178, %s180
      %p184 = scmp.eq.s32.totalorder %s25, 0
      %p185 = por %p183, %p184
      %p186 = scmp.ne.s32.totalorder %s178, %s180
      %p187 = scmp.eq.s32.totalorder %s30, 3
      %p188 = por %p186, %p187
      %p189 = scmp.ne.s32.totalorder %s180, %s181
      %p190 = scmp.eq.s32.totalorder %s30, 0
      %p191 = por %p189, %p190
      %p192 = scmp.ne.s32.totalorder %s180, %s181
      %p193 = scmp.eq.s32.totalorder %s31, 3
      %p194 = por %p192, %p193
      %p196 = scmp.ne.s32.totalorder %s181, %s195
      %p197 = scmp.eq.s32.totalorder %s31, 0
      %p198 = por %p196, %p197
      %s200 = sadd.s32 %s199, 1
      %p203 = scmp.eq.s32.totalorder %s25, 3
      %p204 = scmp.ne.s32.totalorder %s199, %s201
      %p205 = scmp.eq.s32.totalorder %s25, 0
      %p206 = por %p204, %p205
      %p207 = scmp.ne.s32.totalorder %s199, %s201
      %p208 = scmp.eq.s32.totalorder %s30, 3
      %p209 = por %p207, %p208
      %p210 = scmp.ne.s32.totalorder %s201, %s202
      %p211 = scmp.eq.s32.totalorder %s30, 0
      %p212 = por %p210, %p211
      %p213 = scmp.ne.s32.totalorder %s201, %s202
      %p214 = scmp.eq.s32.totalorder %s31, 3
      %p215 = por %p213, %p214
      %p217 = scmp.ne.s32.totalorder %s202, %s216
      %p218 = scmp.eq.s32.totalorder %s31, 0
      %p219 = por %p217, %p218
      %s220 = ssub.s32 %s32, %s44
      %p221 = scmp.eq.s32.totalorder %s220, 0
      %s223 = sadd.s32 %s222, 1
      %s224 = scalar_select %p221, %s222, %s223
      %p227 = pneg %p221
      %p228 = scmp.eq.s32.totalorder %s25, 3
      %p229 = por %p227, %p228
      %p230 = scmp.ne.s32.totalorder %s222, %s225
      %p231 = scmp.eq.s32.totalorder %s25, 0
      %p232 = por %p230, %p231
      %p233 = scmp.ne.s32.totalorder %s222, %s225
      %p234 = scmp.eq.s32.totalorder %s30, 3
      %p235 = por %p233, %p234
      %p236 = scmp.ne.s32.totalorder %s225, %s226
      %p237 = scmp.eq.s32.totalorder %s30, 0
      %p238 = por %p236, %p237
      %p239 = scmp.ne.s32.totalorder %s225, %s226
      %p240 = scmp.eq.s32.totalorder %s31, 3
      %p241 = por %p239, %p240
      %p243 = scmp.ne.s32.totalorder %s226, %s242
      %p244 = scmp.eq.s32.totalorder %s31, 0
      %p245 = por %p243, %p244
      %s246 = ssub.s32 %s32, %s44
      %p247 = scmp.eq.s32.totalorder %s246, 0
      %s249 = sadd.s32 %s248, 1
      %s250 = scalar_select %p247, %s248, %s249
      %p253 = pneg %p247
      %p254 = scmp.eq.s32.totalorder %s25, 3
      %p255 = por %p253, %p254
      %p256 = scmp.ne.s32.totalorder %s248, %s251
      %p257 = scmp.eq.s32.totalorder %s25, 0
      %p258 = por %p256, %p257
      %p259 = scmp.ne.s32.totalorder %s248, %s251
      %p260 = scmp.eq.s32.totalorder %s30, 3
      %p261 = por %p259, %p260
      %p262 = scmp.ne.s32.totalorder %s251, %s252
      %p263 = scmp.eq.s32.totalorder %s30, 0
      %p264 = por %p262, %p263
      %p265 = scmp.ne.s32.totalorder %s251, %s252
      %p266 = scmp.eq.s32.totalorder %s31, 3
      %p267 = por %p265, %p266
      %p269 = scmp.ne.s32.totalorder %s252, %s268
      %p270 = scmp.eq.s32.totalorder %s31, 0
      %p271 = por %p269, %p270
      %p272 = scmp.le.s32.totalorder 1, %s25
      %p273 = scmp.lt.s32.totalorder %s25, 5
      %p274 = pnand %p272, %p273
      %p275 = pneg %p274
      // Predicated region
      $region9: #{tpu_custom_call.1} parent=5 // pred_check
        _
      $region10: #{tpu_custom_call.1} parent=5 // pred_check_branch
        %277 = sbr.rel (%p274) target = $region12
      $region11: #{tpu_custom_call.1} parent=5 // pred_region
        %s278 = ssub.s32 %s25, 1
        // Predicated region
        $region13: #{tpu_custom_call.1} parent=11 // pred_check
          %p279 = pneg %p86
        $region14: #{tpu_custom_call.1} parent=11 // pred_check_branch
          %281 = sbr.rel (%p279) target = $region16
        $region15: #{tpu_custom_call.1} parent=11 // pred_region
          _
        $region16: #{tpu_custom_call.1} parent=11 // pred_fallthru
          _
        // Predicated region
        $region17: #{tpu_custom_call.1} parent=11 // pred_check
          %p282 = pneg %p107
        $region18: #{tpu_custom_call.1} parent=11 // pred_check_branch
          %284 = sbr.rel (%p282) target = $region20
        $region19: #{tpu_custom_call.1} parent=11 // pred_region
          _
        $region20: #{tpu_custom_call.1} parent=11 // pred_fallthru
          _
        // Predicated region
        $region21: #{tpu_custom_call.1} parent=11 // pred_check
          %p285 = pneg %p128
        $region22: #{tpu_custom_call.1} parent=11 // pred_check_branch
          %287 = sbr.rel (%p285) target = $region24
        $region23: #{tpu_custom_call.1} parent=11 // pred_region
          _
        $region24: #{tpu_custom_call.1} parent=11 // pred_fallthru
          _
        // Predicated region
        $region25: #{tpu_custom_call.1} parent=11 // pred_check
          %p288 = pneg %p149
        $region26: #{tpu_custom_call.1} parent=11 // pred_check_branch
          %290 = sbr.rel (%p288) target = $region28
        $region27: #{tpu_custom_call.1} parent=11 // pred_region
          _
        $region28: #{tpu_custom_call.1} parent=11 // pred_fallthru
          _
        // Predicated region
        $region29: #{tpu_custom_call.1} parent=11 // pred_check
          %p291 = pneg %p170
        $region30: #{tpu_custom_call.1} parent=11 // pred_check_branch
          %293 = sbr.rel (%p291) target = $region32
        $region31: #{tpu_custom_call.1} parent=11 // pred_region
          _
        $region32: #{tpu_custom_call.1} parent=11 // pred_fallthru
          _
        // Predicated region
        $region33: #{tpu_custom_call.1} parent=11 // pred_check
          %p294 = pneg %p191
        $region34: #{tpu_custom_call.1} parent=11 // pred_check_branch
          %296 = sbr.rel (%p294) target = $region36
        $region35: #{tpu_custom_call.1} parent=11 // pred_region
          _
        $region36: #{tpu_custom_call.1} parent=11 // pred_fallthru
          _
        // Predicated region
        $region37: #{tpu_custom_call.1} parent=11 // pred_check
          %p297 = pneg %p212
        $region38: #{tpu_custom_call.1} parent=11 // pred_check_branch
          %299 = sbr.rel (%p297) target = $region40
        $region39: #{tpu_custom_call.1} parent=11 // pred_region
          _
        $region40: #{tpu_custom_call.1} parent=11 // pred_fallthru
          _
      $region12: #{tpu_custom_call.1} parent=5 // pred_fallthru
        _
      %p300 = scmp.lt.s32.totalorder %s25, 4
      // Predicated region
      $region41: #{tpu_custom_call.1} parent=5 // pred_check
        %p301 = pneg %p300
      $region42: #{tpu_custom_call.1} parent=5 // pred_check_branch
        %303 = sbr.rel (%p301) target = $region44
      $region43: #{tpu_custom_call.1} parent=5 // pred_region
        // Predicated region
        $region45: #{tpu_custom_call.1} parent=43 // pred_check
          %p304 = pneg %p59
        $region46: #{tpu_custom_call.1} parent=43 // pred_check_branch
          %306 = sbr.rel (%p304) target = $region48
        $region47: #{tpu_custom_call.1} parent=43 // pred_region
          %s307 = sand.u32 %s49, 1
          %s308 = scalar_lea.sflag [#allocation5], %s307
          %s309 = sand.u32 %s49, 1
          %s310 = smul.addr %s309, 128
          %s311 = scalar_lea.vmem [#allocation4], %s310
          %s312 = smul.u32 8, %s33
          %314 = vsyncadd %s308, 0
          %s315 = smul.addr %s312, 2
          %s316 = smul.addr %s32, 32
          %s317 = sadd.s32 %s315, %s316
          %s318 = smul.addr %s317, 8
          %s319 = scalar_lea.hbm %s0, %s318
          %s320 = sshll.u32 %s319, 4
          %s321 = int_to_ptr.hbm [resolvable:$true] %s320
          %s322 = sshll.u32 %s311, 4
          %s323 = int_to_ptr.vmem [resolvable:$true] %s322
          %328 = dma.hbm_to_vmem [thread:$0]  %s321, 2048, %s323, %s308, 128, 128, 8
        $region48: #{tpu_custom_call.1} parent=43 // pred_fallthru
          _
      $region44: #{tpu_custom_call.1} parent=5 // pred_fallthru
        _
      %p329 = scmp.le.s32.totalorder 1, %s25
      %p330 = scmp.lt.s32.totalorder %s25, 5
      %p331 = pnand %p329, %p330
      %p332 = pneg %p331
      // Predicated region
      $region49: #{tpu_custom_call.1} parent=5 // pred_check
        _
      $region50: #{tpu_custom_call.1} parent=5 // pred_check_branch
        %334 = sbr.rel (%p331) target = $region52
      $region51: #{tpu_custom_call.1} parent=5 // pred_region
        %s335 = ssub.s32 %s25, 1
        %s336 = sand.u32 %s52, 1
        %s337 = scalar_lea.sflag [#allocation5], %s336
        %s338 = sand.u32 %s52, 1
        %s339 = smul.addr %s338, 128
        %s340 = scalar_lea.vmem [#allocation4], %s339
        // Predicated region
        $region53: #{tpu_custom_call.1} parent=51 // pred_check
          %p341 = pneg %p65
        $region54: #{tpu_custom_call.1} parent=51 // pred_check_branch
          %343 = sbr.rel (%p341) target = $region56
        $region55: #{tpu_custom_call.1} parent=51 // pred_region
          %345 = dma.done %s337, 2048
        $region56: #{tpu_custom_call.1} parent=51 // pred_fallthru
          _
        %s346 = sand.u32 %s52, 1
        %s347 = scalar_lea.sflag [#allocation5], %s346
        %s348 = sand.u32 %s52, 1
        %s349 = smul.addr %s348, 128
        %s350 = scalar_lea.vmem [#allocation4], %s349
        %p351 = pneg %p65
        %p352 = pneg %p62
        %p353 = pneg %p86
        %p354 = pneg %p83
        %p355 = pneg %p107
        %p356 = pneg %p104
        %p357 = pneg %p128
        %p358 = pneg %p125
        %p359 = pneg %p149
        %p360 = pneg %p146
        %p361 = pneg %p170
        %p362 = pneg %p167
        %p363 = pneg %p191
        %p364 = pneg %p188
        %p365 = pneg %p212
        %p366 = pneg %p209
        %p367 = pneg %p238
        %p368 = pneg %p235
        %s369 = sand.u32 %s225, 1
        %s370 = scalar_lea.sflag [#allocation6], %s369
        %s371 = sand.u32 %s225, 1
        %s372 = smul.addr %s371, 16
        %s373 = scalar_lea.vmem [#allocation7], %s372
        %p374 = pneg %p264
        %p375 = pneg %p261
        %s376 = sand.u32 %s251, 1
        %s377 = scalar_lea.sflag [#allocation9], %s376
        %s378 = sand.u32 %s251, 1
        %s379 = smul.addr %s378, 16
        %s380 = scalar_lea.vmem [#allocation8], %s379
        %s381 = smul.u32 8, %s35
        %v382 = vld [vmem:[%s340] sm:$0xff]
        %v383 = vld [vmem:[%s340 + $0x8] sm:$0xff]
        %v384 = vld [vmem:[%s340 + $0x10] sm:$0xff]
        %v385 = vld [vmem:[%s340 + $0x18] sm:$0xff]
        %v386 = vld [vmem:[%s340 + $0x20] sm:$0xff]
        %v387 = vld [vmem:[%s340 + $0x28] sm:$0xff]
        %v388 = vld [vmem:[%s340 + $0x30] sm:$0xff]
        %v389 = vld [vmem:[%s340 + $0x38] sm:$0xff]
        %v390 = vld [vmem:[%s340 + $0x40] sm:$0xff]
        %v391 = vld [vmem:[%s340 + $0x48] sm:$0xff]
        %v392 = vld [vmem:[%s340 + $0x50] sm:$0xff]
        %v393 = vld [vmem:[%s340 + $0x58] sm:$0xff]
        %v394 = vld [vmem:[%s340 + $0x60] sm:$0xff]
        %v395 = vld [vmem:[%s340 + $0x68] sm:$0xff]
        %v396 = vld [vmem:[%s340 + $0x70] sm:$0xff]
        %v397 = vld [vmem:[%s340 + $0x78] sm:$0xff]
        %s398 = smul.u32 %s35, 8
        %vm399 = vcmask 261120
        %v400 = vsel %vm399, %v382, 0.0
        %v401 = vsel %vm399, %v383, 0.0
        %v402 = vadd.f32 %v400, %v401
        %v403 = vrot.slane %v402, 4
        %v404 = vadd.f32 %v402, %v403
        %v405 = vrot.slane %v404, 2
        %v406 = vadd.f32 %v404, %v405
        %v407 = vrot.slane %v406, 1
        %v408 = vadd.f32 %v406, %v407
        %v409 = vsel %vm399, %v384, 0.0
        %v410 = vsel %vm399, %v385, 0.0
        %v411 = vadd.f32 %v409, %v410
        %v412 = vrot.slane %v411, 4
        %v413 = vadd.f32 %v411, %v412
        %v414 = vrot.slane %v413, 2
        %v415 = vadd.f32 %v413, %v414
        %v416 = vrot.slane %v415, 1
        %v417 = vadd.f32 %v415, %v416
        %v418 = vsel %vm399, %v386, 0.0
        %v419 = vsel %vm399, %v387, 0.0
        %v420 = vadd.f32 %v418, %v419
        %v421 = vrot.slane %v420, 4
        %v422 = vadd.f32 %v420, %v421
        %v423 = vrot.slane %v422, 2
        %v424 = vadd.f32 %v422, %v423
        %v425 = vrot.slane %v424, 1
        %v426 = vadd.f32 %v424, %v425
        %v427 = vsel %vm399, %v388, 0.0
        %v428 = vsel %vm399, %v389, 0.0
        %v429 = vadd.f32 %v427, %v428
        %v430 = vrot.slane %v429, 4
        %v431 = vadd.f32 %v429, %v430
        %v432 = vrot.slane %v431, 2
        %v433 = vadd.f32 %v431, %v432
        %v434 = vrot.slane %v433, 1
        %v435 = vadd.f32 %v433, %v434
        %v436 = vsel %vm399, %v390, 0.0
        %v437 = vsel %vm399, %v391, 0.0
        %v438 = vadd.f32 %v436, %v437
        %v439 = vrot.slane %v438, 4
        %v440 = vadd.f32 %v438, %v439
        %v441 = vrot.slane %v440, 2
        %v442 = vadd.f32 %v440, %v441
        %v443 = vrot.slane %v442, 1
        %v444 = vadd.f32 %v442, %v443
        %v445 = vsel %vm399, %v392, 0.0
        %v446 = vsel %vm399, %v393, 0.0
        %v447 = vadd.f32 %v445, %v446
        %v448 = vrot.slane %v447, 4
        %v449 = vadd.f32 %v447, %v448
        %v450 = vrot.slane %v449, 2
        %v451 = vadd.f32 %v449, %v450
        %v452 = vrot.slane %v451, 1
        %v453 = vadd.f32 %v451, %v452
        %v454 = vsel %vm399, %v394, 0.0
        %v455 = vsel %vm399, %v395, 0.0
        %v456 = vadd.f32 %v454, %v455
        %v457 = vrot.slane %v456, 4
        %v458 = vadd.f32 %v456, %v457
        %v459 = vrot.slane %v458, 2
        %v460 = vadd.f32 %v458, %v459
        %v461 = vrot.slane %v460, 1
        %v462 = vadd.f32 %v460, %v461
        %v463 = vsel %vm399, %v396, 0.0
        %v464 = vsel %vm399, %v397, 0.0
        %v465 = vadd.f32 %v463, %v464
        %v466 = vrot.slane %v465, 4
        %v467 = vadd.f32 %v465, %v466
        %v468 = vrot.slane %v467, 2
        %v469 = vadd.f32 %v467, %v468
        %v470 = vrot.slane %v469, 1
        %v471 = vadd.f32 %v469, %v470
        %v472 = vmul.f32 %v408, 0.0625
        %v473 = vmul.f32 %v417, 0.0625
        %v474 = vmul.f32 %v426, 0.0625
        %v475 = vmul.f32 %v435, 0.0625
        %v476 = vmul.f32 %v444, 0.0625
        %v477 = vmul.f32 %v453, 0.0625
        %v478 = vmul.f32 %v462, 0.0625
        %v479 = vmul.f32 %v471, 0.0625
        %vm488 = vcmask 1041409
        %v489 = vsel %vm488, %v473, %v472
        %vm490 = vcmask 1042434
        %v491 = vsel %vm490, %v474, %v489
        %vm492 = vcmask 1043459
        %v493 = vsel %vm492, %v475, %v491
        %vm494 = vcmask 1044484
        %v495 = vsel %vm494, %v476, %v493
        %vm496 = vcmask 1045509
        %v497 = vsel %vm496, %v477, %v495
        %vm498 = vcmask 1046534
        %v499 = vsel %vm498, %v478, %v497
        %vm500 = vcmask 1047559
        %v501 = vsel %vm500, %v479, %v499
        %s503 = scalar_lea.vmem [#allocation2], %s398
        %504 = vst.msk [vmem:[%s503] sm:$0xff] %vm399, %v501
        %p505 = scmp.eq.s32.totalorder %s35, 0
        // Predicated region
        $region57: #{tpu_custom_call.1} parent=51 // pred_check
          %p506 = pneg %p505
        $region58: #{tpu_custom_call.1} parent=51 // pred_check_branch
          %508 = sbr.rel (%p506) target = $region60
        $region59: #{tpu_custom_call.1} parent=51 // pred_region
          %509 = vst.msk [vmem:[#allocation3] sm:$0xff] %vm399, 0.0
          %510 = vst.msk [vmem:[#allocation3 + $0x8] sm:$0xff] %vm399, 0.0
        $region60: #{tpu_custom_call.1} parent=51 // pred_fallthru
          _
        %v511 = vld [vmem:[#allocation3] sm:$0xff]
        %v512 = vld [vmem:[#allocation3 + $0x8] sm:$0xff]
        %v513 = vadd.f32 %v400, %v409
        %v514 = vadd.f32 %v513, %v418
        %v515 = vadd.f32 %v514, %v427
        %v516 = vadd.f32 %v515, %v436
        %v517 = vadd.f32 %v516, %v445
        %v518 = vadd.f32 %v517, %v454
        %v519 = vadd.f32 %v518, %v463
        %v520 = vadd.f32 %v401, %v410
        %v521 = vadd.f32 %v520, %v419
        %v522 = vadd.f32 %v521, %v428
        %v523 = vadd.f32 %v522, %v437
        %v524 = vadd.f32 %v523, %v446
        %v525 = vadd.f32 %v524, %v455
        %v526 = vadd.f32 %v525, %v464
        %v527 = vadd.f32 %v511, %v519
        %v528 = vadd.f32 %v512, %v526
        %529 = vst.msk [vmem:[#allocation3] sm:$0xff] %vm399, %v527
        %530 = vst.msk [vmem:[#allocation3 + $0x8] sm:$0xff] %vm399, %v528
        %p531 = scmp.eq.s32.totalorder %s35, 1
        // Predicated region
        $region61: #{tpu_custom_call.1} parent=51 // pred_check
          %p532 = pneg %p531
        $region62: #{tpu_custom_call.1} parent=51 // pred_check_branch
          %534 = sbr.rel (%p532) target = $region64
        $region63: #{tpu_custom_call.1} parent=51 // pred_region
          %v535 = vld [vmem:[#allocation2] sm:$0xff]
          %v536 = vld [vmem:[#allocation2 + $0x8] sm:$0xff]
          %v537 = vld [vmem:[%s1] sm:$0xff]
          %v538 = vld [vmem:[%s1 + $0x8] sm:$0xff]
          %v539 = vld [vmem:[%s1 + $0x10] sm:$0xff]
          %v540 = vld [vmem:[%s1 + $0x18] sm:$0xff]
          %v542 = vsel %vm399, %v535, 0
          %v545 = vsel %vm399, %v536, 0
          %547 = vmatpush.msra.mxu0 0.0
          %548 = vmatpush.msra.mxu0 0.0
          %549 = vmatpush.msra.mxu0 0.0
          %550 = vmatpush.msra.mxu0 0.0
          %551 = vmatpush.msra.mxu0 0.0
          %552 = vmatpush.msra.mxu0 0.0
          %553 = vmatpush.msra.mxu0 0.0
          %554 = vmatpush.msra.mxu0 0.0
          %555 = vmatpush.msra.mxu0 0.0
          %556 = vmatpush.msra.mxu0 0.0
          %557 = vmatpush.msra.mxu0 0.0
          %558 = vmatpush.msra.mxu0 0.0
          %559 = vmatpush.msra.mxu0 %v540
          %560 = vmatpush.msra.mxu0 %v539
          %561 = vmatpush.msra.mxu0 %v538
          %562 = vmatpush.msra.mxu0 %v537
          %563 = vmatmul.f32.gmra.mxu0 %v542
          %v564 = vpop.f32.mrf.mxu0
          %v565 = vadd.f32 0.0, %v564
          %566 = vmatmul.f32.gmra.mxu0 %v545
          %v567 = vpop.f32.mrf.mxu0
          %v568 = vadd.f32 0.0, %v567
          %569 = vdwg.mxu0
          %v570 = vld [vmem:[%s2] sm:$0x1]
          %v572 = vperm.slane %v570, 0
          %v574 = vmul.f32 %v565, %v572
          %v575 = vmul.f32 %v568, %v572
          %v576 = vld [vmem:[%s3] sm:$0x1]
          %v578 = vperm.slane %v576, 0
          %v580 = vadd.f32 %v574, %v578
          %v581 = vadd.f32 %v575, %v578
          %v582 = vadd.f32 %v580, 3.0
          %v583 = vadd.f32 %v581, 3.0
          %v584 = vmax.f32 %v582, 0.0
          %v585 = vmax.f32 %v583, 0.0
          %v586 = vmin.f32 %v584, 6.0
          %v587 = vmin.f32 %v585, 6.0
          %v588 = vmul.f32 %v586, 0.16666667
          %v589 = vmul.f32 %v587, 0.16666667
          %v590 = vmul.f32 %v580, %v588
          %v591 = vmul.f32 %v581, %v589
          %v592 = vld [vmem:[%s4] sm:$0xff]
          %v593 = vld [vmem:[%s5] sm:$0x1]
          %v595 = vperm.slane %v593, 0
          %vm597 = vcmask 64512
          %v599 = vsel %vm597, %v590, 0
          %v602 = vsel %vm597, %v591, 0
          %604 = vmatpush.msra.mxu0 0.0
          %605 = vmatpush.msra.mxu0 0.0
          %606 = vmatpush.msra.mxu0 0.0
          %607 = vmatpush.msra.mxu0 0.0
          %608 = vmatpush.msra.mxu0 0.0
          %609 = vmatpush.msra.mxu0 0.0
          %610 = vmatpush.msra.mxu0 0.0
          %611 = vmatpush.msra.mxu0 0.0
          %612 = vmatpush.msra.mxu0 0.0
          %613 = vmatpush.msra.mxu0 0.0
          %614 = vmatpush.msra.mxu0 0.0
          %615 = vmatpush.msra.mxu0 0.0
          %616 = vmatpush.msra.mxu0 0.0
          %617 = vmatpush.msra.mxu0 0.0
          %618 = vmatpush.msra.mxu0 0.0
          %619 = vmatpush.msra.mxu0 %v592
          %620 = vmatmul.f32.gmra.mxu0 %v599
          %v621 = vpop.f32.mrf.mxu0
          %v622 = vadd.f32 %v595, %v621
          %623 = vmatmul.f32.gmra.mxu0 %v602
          %v624 = vpop.f32.mrf.mxu0
          %v625 = vadd.f32 %v595, %v624
          %626 = vdwg.mxu0
          %v627 = vsub.f32 0.0, %v622
          %v628 = vsub.f32 0.0, %v625
          %v629 = vmul.f32 %v627, 1.442695
          %v630 = vpow.pop %v629
          %v631 = vmul.f32 %v628, 1.442695
          %v632 = vpow.pop %v631
          %v633 = vadd.f32 %v630, 1.0
          %v634 = vadd.f32 %v632, 1.0
          %v635 = vrcp.pop %v633
          %v636 = vmul.f32 %v633, %v635
          %v637 = vsub.f32 1.0, %v636
          %v638 = vmul.f32 %v635, %v637
          %v639 = vadd.f32 %v635, %v638
          %vm640 = vweird.f32 %v633
          %vm641 = vweird.f32 %v635
          %vm642 = vmor %vm640, %vm641
          %v643 = vsel %vm642, %v635, %v639
          %v644 = vand.u32 2147483647, %v633
          %vm645 = vcmp.eq.f32.partialorder %v644, 8.507059e+37
          %v646 = vand.u32 %v633, 2147483648
          %v647 = vor.u32 1.1754944e-38, %v646
          %v648 = vsel %vm645, %v647, %v643
          %v649 = vmul.f32 1.0, %v648
          %v650 = vrcp.pop %v634
          %v651 = vmul.f32 %v634, %v650
          %v652 = vsub.f32 1.0, %v651
          %v653 = vmul.f32 %v650, %v652
          %v654 = vadd.f32 %v650, %v653
          %vm655 = vweird.f32 %v634
          %vm656 = vweird.f32 %v650
          %vm657 = vmor %vm655, %vm656
          %v658 = vsel %vm657, %v650, %v654
          %v659 = vand.u32 2147483647, %v634
          %vm660 = vcmp.eq.f32.partialorder %v659, 8.507059e+37
          %v661 = vand.u32 %v634, 2147483648
          %v662 = vor.u32 1.1754944e-38, %v661
          %v663 = vsel %vm660, %v662, %v658
          %v664 = vmul.f32 1.0, %v663
          %665 = vst.msk [vmem:[%s373] sm:$0xff] %vm399, %v649
          %666 = vst.msk [vmem:[%s373 + $0x8] sm:$0xff] %vm399, %v664
          %v667 = vld [vmem:[#allocation3] sm:$0xff]
          %v668 = vld [vmem:[#allocation3 + $0x8] sm:$0xff]
          %v669 = vmul.f32 %v667, 0.0625
          %v670 = vmul.f32 %v668, 0.0625
          %v671 = vld [vmem:[%s1] sm:$0xff]
          %v672 = vld [vmem:[%s1 + $0x8] sm:$0xff]
          %v673 = vld [vmem:[%s1 + $0x10] sm:$0xff]
          %v674 = vld [vmem:[%s1 + $0x18] sm:$0xff]
          %v676 = vsel %vm399, %v669, 0
          %v679 = vsel %vm399, %v670, 0
          %681 = vmatpush.msra.mxu0 0.0
          %682 = vmatpush.msra.mxu0 0.0
          %683 = vmatpush.msra.mxu0 0.0
          %684 = vmatpush.msra.mxu0 0.0
          %685 = vmatpush.msra.mxu0 0.0
          %686 = vmatpush.msra.mxu0 0.0
          %687 = vmatpush.msra.mxu0 0.0
          %688 = vmatpush.msra.mxu0 0.0
          %689 = vmatpush.msra.mxu0 0.0
          %690 = vmatpush.msra.mxu0 0.0
          %691 = vmatpush.msra.mxu0 0.0
          %692 = vmatpush.msra.mxu0 0.0
          %693 = vmatpush.msra.mxu0 %v674
          %694 = vmatpush.msra.mxu0 %v673
          %695 = vmatpush.msra.mxu0 %v672
          %696 = vmatpush.msra.mxu0 %v671
          %697 = vmatmul.f32.gmra.mxu0 %v676
          %v698 = vpop.f32.mrf.mxu0
          %v699 = vadd.f32 0.0, %v698
          %700 = vmatmul.f32.gmra.mxu0 %v679
          %v701 = vpop.f32.mrf.mxu0
          %v702 = vadd.f32 0.0, %v701
          %703 = vdwg.mxu0
          %v704 = vld [vmem:[%s2] sm:$0x1]
          %v706 = vperm.slane %v704, 0
          %v708 = vmul.f32 %v699, %v706
          %v709 = vmul.f32 %v702, %v706
          %v710 = vld [vmem:[%s3] sm:$0x1]
          %v712 = vperm.slane %v710, 0
          %v714 = vadd.f32 %v708, %v712
          %v715 = vadd.f32 %v709, %v712
          %v716 = vadd.f32 %v714, 3.0
          %v717 = vadd.f32 %v715, 3.0
          %v718 = vmax.f32 %v716, 0.0
          %v719 = vmax.f32 %v717, 0.0
          %v720 = vmin.f32 %v718, 6.0
          %v721 = vmin.f32 %v719, 6.0
          %v722 = vmul.f32 %v720, 0.16666667
          %v723 = vmul.f32 %v721, 0.16666667
          %v724 = vmul.f32 %v714, %v722
          %v725 = vmul.f32 %v715, %v723
          %v726 = vld [vmem:[%s6] sm:$0xff]
          %v727 = vld [vmem:[%s7] sm:$0x1]
          %v729 = vperm.slane %v727, 0
          %v732 = vsel %vm597, %v724, 0
          %v735 = vsel %vm597, %v725, 0
          %737 = vmatpush.msra.mxu0 0.0
          %738 = vmatpush.msra.mxu0 0.0
          %739 = vmatpush.msra.mxu0 0.0
          %740 = vmatpush.msra.mxu0 0.0
          %741 = vmatpush.msra.mxu0 0.0
          %742 = vmatpush.msra.mxu0 0.0
          %743 = vmatpush.msra.mxu0 0.0
          %744 = vmatpush.msra.mxu0 0.0
          %745 = vmatpush.msra.mxu0 0.0
          %746 = vmatpush.msra.mxu0 0.0
          %747 = vmatpush.msra.mxu0 0.0
          %748 = vmatpush.msra.mxu0 0.0
          %749 = vmatpush.msra.mxu0 0.0
          %750 = vmatpush.msra.mxu0 0.0
          %751 = vmatpush.msra.mxu0 0.0
          %752 = vmatpush.msra.mxu0 %v726
          %753 = vmatmul.f32.gmra.mxu0 %v732
          %v754 = vpop.f32.mrf.mxu0
          %v755 = vadd.f32 %v729, %v754
          %756 = vmatmul.f32.gmra.mxu0 %v735
          %v757 = vpop.f32.mrf.mxu0
          %v758 = vadd.f32 %v729, %v757
          %759 = vdwg.mxu0
          %v760 = vsub.f32 0.0, %v755
          %v761 = vsub.f32 0.0, %v758
          %v762 = vmul.f32 %v760, 1.442695
          %v763 = vpow.pop %v762
          %v764 = vmul.f32 %v761, 1.442695
          %v765 = vpow.pop %v764
          %v766 = vadd.f32 %v763, 1.0
          %v767 = vadd.f32 %v765, 1.0
          %v768 = vrcp.pop %v766
          %v769 = vmul.f32 %v766, %v768
          %v770 = vsub.f32 1.0, %v769
          %v771 = vmul.f32 %v768, %v770
          %v772 = vadd.f32 %v768, %v771
          %vm773 = vweird.f32 %v766
          %vm774 = vweird.f32 %v768
          %vm775 = vmor %vm773, %vm774
          %v776 = vsel %vm775, %v768, %v772
          %v777 = vand.u32 2147483647, %v766
          %vm778 = vcmp.eq.f32.partialorder %v777, 8.507059e+37
          %v779 = vand.u32 %v766, 2147483648
          %v780 = vor.u32 1.1754944e-38, %v779
          %v781 = vsel %vm778, %v780, %v776
          %v782 = vmul.f32 1.0, %v781
          %v783 = vrcp.pop %v767
          %v784 = vmul.f32 %v767, %v783
          %v785 = vsub.f32 1.0, %v784
          %v786 = vmul.f32 %v783, %v785
          %v787 = vadd.f32 %v783, %v786
          %vm788 = vweird.f32 %v767
          %vm789 = vweird.f32 %v783
          %vm790 = vmor %vm788, %vm789
          %v791 = vsel %vm790, %v783, %v787
          %v792 = vand.u32 2147483647, %v767
          %vm793 = vcmp.eq.f32.partialorder %v792, 8.507059e+37
          %v794 = vand.u32 %v767, 2147483648
          %v795 = vor.u32 1.1754944e-38, %v794
          %v796 = vsel %vm793, %v795, %v791
          %v797 = vmul.f32 1.0, %v796
          %798 = vst.msk [vmem:[%s380] sm:$0xff] %vm399, %v782
          %799 = vst.msk [vmem:[%s380 + $0x8] sm:$0xff] %vm399, %v797
        $region64: #{tpu_custom_call.1} parent=51 // pred_fallthru
          _
        %s800 = sand.u32 %s225, 1
        %s801 = scalar_lea.sflag [#allocation6], %s800
        %s802 = sand.u32 %s225, 1
        %s803 = smul.addr %s802, 16
        %s804 = scalar_lea.vmem [#allocation7], %s803
        %s805 = sand.u32 %s251, 1
        %s806 = scalar_lea.sflag [#allocation9], %s805
        %s807 = sand.u32 %s251, 1
        %s808 = smul.addr %s807, 16
        %s809 = scalar_lea.vmem [#allocation8], %s808
        // Predicated region
        $region65: #{tpu_custom_call.1} parent=51 // pred_check
          %p810 = pneg %p235
        $region66: #{tpu_custom_call.1} parent=51 // pred_check_branch
          %812 = sbr.rel (%p810) target = $region68
        $region67: #{tpu_custom_call.1} parent=51 // pred_region
          %814 = vsyncadd %s801, 0
          %s815 = smul.addr %s34, 2
          %s816 = smul.addr %s815, 8
          %s817 = scalar_lea.hbm %s8, %s816
          %s818 = sshll.u32 %s804, 4
          %s819 = int_to_ptr.vmem [resolvable:$true] %s818
          %s820 = sshll.u32 %s817, 4
          %s821 = int_to_ptr.hbm [resolvable:$true] %s820
          %826 = dma.vmem_to_hbm [thread:$0]  %s819, 256, %s821, %s801, 128, 128, 8
        $region68: #{tpu_custom_call.1} parent=51 // pred_fallthru
          _
        // Predicated region
        $region69: #{tpu_custom_call.1} parent=51 // pred_check
          %p827 = pneg %p261
        $region70: #{tpu_custom_call.1} parent=51 // pred_check_branch
          %829 = sbr.rel (%p827) target = $region72
        $region71: #{tpu_custom_call.1} parent=51 // pred_region
          %831 = vsyncadd %s806, 0
          %s832 = smul.addr %s34, 2
          %s833 = smul.addr %s832, 8
          %s834 = scalar_lea.hbm %s9, %s833
          %s835 = sshll.u32 %s809, 4
          %s836 = int_to_ptr.vmem [resolvable:$true] %s835
          %s837 = sshll.u32 %s834, 4
          %s838 = int_to_ptr.hbm [resolvable:$true] %s837
          %843 = dma.vmem_to_hbm [thread:$0]  %s836, 256, %s838, %s806, 128, 128, 8
        $region72: #{tpu_custom_call.1} parent=51 // pred_fallthru
          _
      $region52: #{tpu_custom_call.1} parent=5 // pred_fallthru
        _
      %p844 = scmp.le.s32.totalorder 2, %s25
      // Predicated region
      $region73: #{tpu_custom_call.1} parent=5 // pred_check
        %p845 = pneg %p844
      $region74: #{tpu_custom_call.1} parent=5 // pred_check_branch
        %847 = sbr.rel (%p845) target = $region76
      $region75: #{tpu_custom_call.1} parent=5 // pred_region
        %s848 = ssub.s32 %s25, 2
        // Predicated region
        $region77: #{tpu_custom_call.1} parent=75 // pred_check
          %p849 = pneg %p241
        $region78: #{tpu_custom_call.1} parent=75 // pred_check_branch
          %851 = sbr.rel (%p849) target = $region80
        $region79: #{tpu_custom_call.1} parent=75 // pred_region
          %s852 = sand.u32 %s226, 1
          %s853 = scalar_lea.sflag [#allocation6], %s852
          %s854 = sand.u32 %s226, 1
          %s855 = smul.addr %s854, 16
          %s856 = scalar_lea.vmem [#allocation7], %s855
          %858 = dma.done %s853, 256
        $region80: #{tpu_custom_call.1} parent=75 // pred_fallthru
          _
        // Predicated region
        $region81: #{tpu_custom_call.1} parent=75 // pred_check
          %p859 = pneg %p267
        $region82: #{tpu_custom_call.1} parent=75 // pred_check_branch
          %861 = sbr.rel (%p859) target = $region84
        $region83: #{tpu_custom_call.1} parent=75 // pred_region
          %s862 = sand.u32 %s252, 1
          %s863 = scalar_lea.sflag [#allocation9], %s862
          %s864 = sand.u32 %s252, 1
          %s865 = smul.addr %s864, 16
          %s866 = scalar_lea.vmem [#allocation8], %s865
          %868 = dma.done %s863, 256
        $region84: #{tpu_custom_call.1} parent=75 // pred_fallthru
          _
      $region76: #{tpu_custom_call.1} parent=5 // pred_fallthru
        _
    $region6: #{tpu_custom_call.1} parent=1 // loop_footer
      %s29 = sadd.s32 1, %s25
    $region7: #{tpu_custom_call.1} parent=1 // loop_footer_branch
      %24 = sbr.rel target = $region3
    $region8: #{tpu_custom_call.1} parent=1 // loop_exit
      _
    %869 = vsyncpa [#allocation5], 1
    %s870 = scalar_lea.sflag [#allocation5], 1
    %871 = vsyncpa %s870, 1
    %872 = vsyncpa [#allocation6], 1
    %s873 = scalar_lea.sflag [#allocation6], 1
    %874 = vsyncpa %s873, 1
    %875 = vsyncpa [#allocation9], 1
    %s876 = scalar_lea.sflag [#allocation9], 1
    %877 = vsyncpa %s876, 1

</llo_original>
